<compile_context>
chip_gen: v5e
topology: v5e:2x2
jax: 0.10.0
libtpu: 0.0.40
codegen_flags: <defaults>
</compile_context>

<pallas_src>
import functools

import jax
import jax.numpy as jnp
from jax import lax
from jax.experimental import pallas as pl
from jax.experimental.pallas import tpu as pltpu


_TOK_TILE_TARGET = 256            # tokens per grid step (kept a multiple of 16)
_NBUF = 8                         # in-flight row DMAs in the HBM-gather path
_VMEM_TABLE_MAX_BYTES = 4 << 20   # keep table VMEM-resident below this
                                  # (conservative: fits default scoped VMEM
                                  #  with double-buffering on v5e/v6e/v7x)


def _round_up(n, m):
    return (n + m - 1) // m * m


# ---------------------------------------------------------------------------
# Fast path: whole embedding table resident in VMEM; per-token row copies.
# Exact (pure data movement), no MXU numerics involved.
# ---------------------------------------------------------------------------
def _embed_vmem_kernel(ids_ref, table_ref, out_ref, *, tok_tile):
    # ids_ref:   SMEM scalar-prefetched flat token ids [n_tok_padded].
    # table_ref: (V, D) embedding table, resident in VMEM across the grid.
    # out_ref:   (tok_tile, D) output block for this token tile.
    base = pl.program_id(0) * tok_tile

    def _copy_row(j, carry):
        tok = ids_ref[base + j]                      # scalar read from SMEM
        out_ref[pl.ds(j, 1), :] = table_ref[pl.ds(tok, 1), :]
        return carry

    lax.fori_loop(0, tok_tile, _copy_row, 0)


# ---------------------------------------------------------------------------
# General path: table stays in HBM; gather tok_tile rows per grid step with a
# rolling window of `nbuf` in-flight row DMAs into a VMEM slab, then write the
# whole (tok_tile, D) slab densely to the output block.
# ---------------------------------------------------------------------------
def _embed_hbm_kernel(ids_ref, table_hbm, out_ref, row_buf, copy_sems, *,
                      tok_tile, nbuf):
    # ids_ref:   SMEM scalar-prefetched flat token ids [n_tok_padded].
    # table_hbm: (V, D) embedding table ref left in HBM (pl.ANY).
    # out_ref:   (tok_tile, D) output block.
    # row_buf:   VMEM scratch (tok_tile, D) gather slab.
    # copy_sems: DMA semaphores, one per in-flight slot.
    base = pl.program_id(0) * tok_tile

    def _start(row, slot):
        tok = ids_ref[base + row]
        pltpu.make_async_copy(
            table_hbm.at[pl.ds(tok, 1), :],
            row_buf.at[pl.ds(row, 1), :],
            copy_sems.at[slot],
        ).start()

    def _wait(row, slot):
        # Only the semaphore + transfer shape matter for the wait descriptor.
        pltpu.make_async_copy(
            table_hbm.at[pl.ds(0, 1), :],
            row_buf.at[pl.ds(row, 1), :],
            copy_sems.at[slot],
        ).wait()

    n_prime = min(nbuf, tok_tile)
    n_steady = max(tok_tile - nbuf, 0)

    # Prime: fill the in-flight window.
    def _prime(j, c):
        _start(j, j)
        return c
    lax.fori_loop(0, n_prime, _prime, 0)

    # Steady state: retire copy j, immediately issue copy j+nbuf on its slot.
    def _steady(j, c):
        slot = j % nbuf
        _wait(j, slot)
        _start(j + nbuf, slot)
        return c
    lax.fori_loop(0, n_steady, _steady, 0)

    # Drain the remaining in-flight copies.
    def _drain(j, c):
        _wait(j, j % nbuf)
        return c
    lax.fori_loop(n_steady, tok_tile, _drain, 0)

    out_ref[...] = row_buf[...]                      # dense (tok_tile, D) store


@functools.partial(jax.jit, static_argnames=("force_hbm",))
def embeddings_forward(x, table, force_hbm=False):
    """Pallas embedding lookup (eval-mode forward of `Embeddings`).

    Args:
      x:         int32 [B, S] token indices.
      table:     [V, D] embedding weight (row pad_idx already zeroed).
      force_hbm: force the HBM manual-DMA gather path (testing / huge tables).

    Returns:
      [B, S, D] embeddings (== table[x]), dtype of `table`.
    """
    B, S = x.shape
    V, D = table.shape
    n_tok = B * S
    itemsize = table.dtype.itemsize

    # Clamp ids into range: PyTorch would raise on OOB indices; clamping avoids
    # a wrong/stale-row read or a chip fault from an out-of-range DMA.
    flat_ids = jnp.clip(x.reshape(n_tok).astype(jnp.int32), 0, V - 1)

    # Token tile: multiple of 16 so the output block stays sublane-dense for
    # both f32 and bf16 tables.
    tok_tile = min(_TOK_TILE_TARGET, _round_up(n_tok, 16))
    n_pad = _round_up(n_tok, tok_tile)
    if n_pad != n_tok:
        flat_ids = jnp.concatenate(
            [flat_ids, jnp.zeros((n_pad - n_tok,), jnp.int32)])
    n_tiles = n_pad // tok_tile
    # NOTE: flat ids are scalar-prefetched into SMEM (4*n_pad bytes); fine for
    # typical B*S. Extremely long sequences would need blocked id prefetch.

    out_shape = jax.ShapeDtypeStruct((n_pad, D), table.dtype)
    out_bytes = n_pad * D * itemsize
    table_bytes = V * D * itemsize

    use_vmem = (not force_hbm) and (table_bytes <= _VMEM_TABLE_MAX_BYTES)

    if use_vmem:
        grid_spec = pltpu.PrefetchScalarGridSpec(
            num_scalar_prefetch=1,
            grid=(n_tiles,),
            in_specs=[
                # Whole table resident in VMEM across the grid (constant map).
                pl.BlockSpec((V, D), lambda i, ids: (0, 0)),
            ],
            out_specs=pl.BlockSpec((tok_tile, D), lambda i, ids: (i, 0)),
        )
        out_flat = pl.pallas_call(
            functools.partial(_embed_vmem_kernel, tok_tile=tok_tile),
            out_shape=out_shape,
            grid_spec=grid_spec,
            compiler_params=pltpu.CompilerParams(
                dimension_semantics=("parallel",)),
            cost_estimate=pl.CostEstimate(
                flops=0, transcendentals=0,
                bytes_accessed=table_bytes + 2 * out_bytes + 4 * n_pad),
        )(flat_ids, table)
    else:
        grid_spec = pltpu.PrefetchScalarGridSpec(
            num_scalar_prefetch=1,
            grid=(n_tiles,),
            in_specs=[
                # Table stays in HBM; rows are gathered with manual DMAs.
                pl.BlockSpec(memory_space=pl.ANY),
            ],
            out_specs=pl.BlockSpec((tok_tile, D), lambda i, ids: (i, 0)),
            scratch_shapes=[
                pltpu.VMEM((tok_tile, D), table.dtype),
                pltpu.SemaphoreType.DMA((_NBUF,)),
            ],
        )
        out_flat = pl.pallas_call(
            functools.partial(_embed_hbm_kernel, tok_tile=tok_tile, nbuf=_NBUF),
            out_shape=out_shape,
            grid_spec=grid_spec,
            compiler_params=pltpu.CompilerParams(
                dimension_semantics=("parallel",)),
            cost_estimate=pl.CostEstimate(
                flops=0, transcendentals=0,
                bytes_accessed=2 * out_bytes + 4 * n_pad),
        )(flat_ids, table)

    return out_flat[:n_tok].reshape(B, S, D)


def make_embedding_table(key, num_embeddings, embedding_dim, pad_idx=0):
    """Deterministic xavier_uniform init, pad row zeroed (matches reset_params)."""
    limit = jnp.sqrt(6.0 / (num_embeddings + embedding_dim))
    w = jax.random.uniform(
        key, (num_embeddings, embedding_dim),
        minval=-limit, maxval=limit, dtype=jnp.float32)
    w = w.at[pad_idx].set(0.0)
    return w


if __name__ == "__main__":
    # Small shapes consistent with the module: vocab=64, hidden=128 (lane-dense),
    # batch=2, seq=8.
    num_embeddings = 64
    embedding_dim = 128
    pad_idx = 0
    B, S = 2, 8

    key = jax.random.PRNGKey(0)
    k_w, k_x = jax.random.split(key)

    table = make_embedding_table(k_w, num_embeddings, embedding_dim, pad_idx)
    x = jax.random.randint(k_x, (B, S), minval=0, maxval=num_embeddings,
                           dtype=jnp.int32)
    # Sprinkle a couple of pad tokens to exercise the zeroed pad row.
    x = x.at[0, 0].set(pad_idx).at[1, -1].set(pad_idx)

    ref = jnp.take(table, x, axis=0)

    # Fast path (auto-selected: 64x128 f32 = 32 KiB table fits VMEM budget).
    out = jax.block_until_ready(embeddings_forward(x, table))
    assert out.shape == (B, S, embedding_dim), out.shape
    assert out.dtype == jnp.float32, out.dtype
    assert jnp.allclose(out, ref), "VMEM path mismatch vs reference gather"
    assert jnp.all(out[0, 0] == 0.0) and jnp.all(out[1, -1] == 0.0)

    # General path (table kept in HBM, rolling-window row DMAs), forced.
    out_hbm = jax.block_until_ready(embeddings_forward(x, table, force_hbm=True))
    assert jnp.allclose(out_hbm, ref), "HBM path mismatch vs reference gather"

    print("KERNEL_OK")
</pallas_src>

<mosaic_0001>
module attributes {stable_mosaic.version = 11 : i64} {
  func.func @_embed_vmem_kernel(%arg0: i32, %arg1: memref<16xi32, #tpu.memory_space<smem>>, %arg2: memref<64x128xf32, #tpu.memory_space<vmem>>, %arg3: memref<16x128xf32, #tpu.memory_space<vmem>>) attributes {dimension_semantics = [#tpu.dimension_semantics<parallel>], iteration_bounds = array<i64: 1>, scalar_prefetch = 1 : i64, scratch_operands = 0 : i64, tpu.core_type = #tpu.core_type<tc>, window_params = [{pipeline_mode = #tpu.pipeline_mode<synchronous>, transform_indices = @transform_0, window_bounds = array<i64: 64, 128>}, {transform_indices = @transform_1, window_bounds = array<i64: 16, 128>}]} {
    %c16_i32 = arith.constant 16 : i32
    %0 = arith.muli %arg0, %c16_i32 : i32
    %c0_i32 = arith.constant 0 : i32
    %c16_i32_0 = arith.constant 16 : i32
    %1 = arith.addi %c0_i32, %c16_i32_0 : i32
    %c1_i32 = arith.constant 1 : i32
    scf.for %arg4 = %c0_i32 to %1 step %c1_i32  : i32 {
      %2 = arith.addi %0, %arg4 : i32
      %3 = arith.index_cast %2 : i32 to index
      %4 = memref.load %arg1[%3] : memref<16xi32, #tpu.memory_space<smem>>
      %5 = arith.index_cast %4 : i32 to index
      %c0 = arith.constant 0 : index
      %6 = vector.load %arg2[%5, %c0] : memref<64x128xf32, #tpu.memory_space<vmem>>, vector<1x128xf32>
      %7 = arith.index_cast %arg4 : i32 to index
      %c0_2 = arith.constant 0 : index
      %8 = vector.load %arg3[%7, %c0_2] : memref<16x128xf32, #tpu.memory_space<vmem>>, vector<1x128xf32>
      tpu.vector_store %arg3[%7, %c0_2], %6 {strides = array<i32>} : memref<16x128xf32, #tpu.memory_space<vmem>>, vector<1x128xf32>,
    }
    %c16_i32_1 = arith.constant 16 : i32
    return
  }
  func.func @transform_0(%arg0: i32, %arg1: memref<16xi32, #tpu.memory_space<smem>>) -> (i32, i32) {
    %c0_i32 = arith.constant 0 : i32
    %c0_i32_0 = arith.constant 0 : i32
    %c0_i32_1 = arith.constant 0 : i32
    return %c0_i32, %c0_i32_0 : i32, i32
  }
  func.func @transform_1(%arg0: i32, %arg1: memref<16xi32, #tpu.memory_space<smem>>) -> (i32, i32) {
    %c0_i32 = arith.constant 0 : i32
    %c0_i32_0 = arith.constant 0 : i32
    return %arg0, %c0_i32 : i32, i32
  }
}

</mosaic_0001>

<llo_original>
// kernel: embeddings_forward.1
$region0: #{embeddings_forward.1}
  #allocation0 [shape = 'u32[]', space=smem, size = 0x4, offset = 0x4, fixed_abs, tag = 'smem constant byte address 0x4 - core index']
  #allocation1 [shape = 'u32[72,128]{1,0:T(1,128)}', space=vmem, size = 0x9000, scoped, tag = 'internal scratch']
  #allocation2 [shape = 's32[1]{0}', space=sflag, size = 0x4, scoped, tag = 'scoped memory for embeddings_forward.1']
  #allocation3 [shape = 'u8[512]{0}', space=smem, size = 0x200, scoped, tag = 'prefetched SMEM operand 0']
  %s0 = inlined_call_operand.vmem [shape: s32[16], index: 0, kind: input, shape index: {}]
  %s1 = inlined_call_operand.hbm [shape: f32[64,128], index: 1, kind: input, shape index: {}]
  %s2 = inlined_call_operand.hbm [shape: f32[16,128], index: 2, kind: output, shape index: {}]
  %s3 = sld [smem:[#allocation0]]
  $region25: #{embeddings_forward.1} parent=0
    _
  %s5 = ssub.s32 1, %s3
  %s6 = scalar_select 0, %s5, %s3
  %s8 = sshll.u32 %s0, 4
  %s9 = int_to_ptr.vmem [resolvable:$true] %s8
  %11 = dma.vmem_to_smem %s9, 16, [#allocation3], [#allocation2]
  %13 = dma.done [#allocation2], 16
  %14 = sfence
  $region1: #{embeddings_forward.1} parent=0
    #allocation4 [shape = 'u8[32768]{0}', space=vmem, size = 0x8000, scoped, tag = 'input window, operand 1, single buffered']
    #allocation5 [shape = 's32[1]{0}', space=sflag, size = 0x4, scoped, tag = 'scoped memory for embeddings_forward.1']
    #allocation6 [shape = 's32[1]{0}', space=sflag, size = 0x4, scoped, tag = 'scoped memory for embeddings_forward.1']
    #allocation7 [shape = 'u8[8192]{0}', space=vmem, size = 0x2000, scoped, tag = 'output window, operand 0, single buffered']
    %15 = vsyncpa [#allocation5], 0
    %16 = vsyncpa [#allocation6], 0
    // Predicated region
    $region2: #{embeddings_forward.1} parent=1 // pred_check
      _
    $region3: #{embeddings_forward.1} parent=1 // pred_check_branch
      %18 = sbr.rel (0) target = $region5
    $region4: #{embeddings_forward.1} parent=1 // pred_region
      %20 = vsyncadd [#allocation5], 0
      %s21 = sshll.u32 %s1, 4
      %s22 = int_to_ptr.hbm [resolvable:$true] %s21
      %s23 = sshll.u32 [#allocation4], 4
      %s24 = int_to_ptr.vmem [resolvable:$true] %s23
      %29 = dma.hbm_to_vmem [thread:$0]  %s22, 1024, %s24, [#allocation5], 128, 128, 8
    $region5: #{embeddings_forward.1} parent=1 // pred_fallthru
      _
    // Predicated region
    $region6: #{embeddings_forward.1} parent=1 // pred_check
      _
    $region7: #{embeddings_forward.1} parent=1 // pred_check_branch
      %31 = sbr.rel (0) target = $region9
    $region8: #{embeddings_forward.1} parent=1 // pred_region
      %33 = dma.done [#allocation5], 1024
    $region9: #{embeddings_forward.1} parent=1 // pred_fallthru
      _
    %s34 = smul.u32 0, 16
    loop: start=0, step=1, limit=16
    $region10: #{embeddings_forward.1} parent=1 // loop_pre_header
      _
    $region11: #{embeddings_forward.1} parent=1 // loop_header
      %s36 = sphi 0, %s40
      %p37 = scmp.ge.s32.totalorder %s36, 16
    $region12: #{embeddings_forward.1} parent=1 // loop_header_branch
      %39 = sbr.rel (%p37) target = $region16
    $region13: #{embeddings_forward.1} parent=1 // loop_body
      %s41 = sadd.s32 %s34, %s36
      %s42 = sld [smem:[#allocation3 + %s41]]
      %s43 = scalar_lea.vmem [#allocation4], %s42
      %v44 = vld [vmem:[%s43] sm:$0x1]
      %s45 = scalar_lea.vmem [#allocation7], %s36
      %46 = vst [vmem:[%s45] sm:$0x1] %v44
    $region14: #{embeddings_forward.1} parent=1 // loop_footer
      %s40 = sadd.s32 1, %s36
    $region15: #{embeddings_forward.1} parent=1 // loop_footer_branch
      %35 = sbr.rel target = $region11
    $region16: #{embeddings_forward.1} parent=1 // loop_exit
      _
    // Predicated region
    $region17: #{embeddings_forward.1} parent=1 // pred_check
      _
    $region18: #{embeddings_forward.1} parent=1 // pred_check_branch
      %48 = sbr.rel (0) target = $region20
    $region19: #{embeddings_forward.1} parent=1 // pred_region
      %50 = vsyncadd [#allocation6], 0
      %s51 = sshll.u32 [#allocation7], 4
      %s52 = int_to_ptr.vmem [resolvable:$true] %s51
      %s53 = sshll.u32 %s2, 4
      %s54 = int_to_ptr.hbm [resolvable:$true] %s53
      %59 = dma.vmem_to_hbm [thread:$0]  %s52, 256, %s54, [#allocation6], 128, 128, 8
    $region20: #{embeddings_forward.1} parent=1 // pred_fallthru
      _
    // Predicated region
    $region21: #{embeddings_forward.1} parent=1 // pred_check
      _
    $region22: #{embeddings_forward.1} parent=1 // pred_check_branch
      %61 = sbr.rel (0) target = $region24
    $region23: #{embeddings_forward.1} parent=1 // pred_region
      %63 = dma.done [#allocation6], 256
    $region24: #{embeddings_forward.1} parent=1 // pred_fallthru
      _
    %64 = vsyncpa [#allocation5], 1
    %65 = vsyncpa [#allocation6], 1

</llo_original>
